<compile_context>
chip_gen: v7x
topology: tpu7x:2x2x1
jax: 0.10.0
libtpu: 0.0.40
codegen_flags: <defaults>
</compile_context>

<pallas_src>
import jax
import jax.numpy as jnp
from jax.experimental import pallas as pl
from jax.experimental.pallas import tpu as pltpu


def _round_up(x, m):
    return (x + m - 1) // m * m


def concat_conv2d(t, x_nchw, w_oihw, bias, ksize=3, compute_dtype=jnp.float32):
    """Equivalent of ConcatConv2d.forward(t, x) for the default config:
    stride=1, padding=0, dilation=1, groups=1, bias=True, transpose=False."""
    N, Cin, H, W = x_nchw.shape
    Cout = w_oihw.shape[0]
    KH = KW = ksize
    Ho, Wo = H - KH + 1, W - KW + 1
    HW = H * W
    LANE = 128

    # Output pixels live on the lane dim, padded to a multiple of 128 so
    # stores are unmasked.  The input gets an extra zero tail that absorbs the
    # largest tap shift, so every tap slice is in-bounds and contiguous.
    OW = _round_up(HW, LANE)
    max_shift = (KH - 1) * W + (KW - 1)
    IW = _round_up(OW + max_shift, LANE)

    out_dtype = x_nchw.dtype
    itemsize = jnp.dtype(compute_dtype).itemsize

    # ---- fold the constant t channel into the bias (valid for padding=0) ---
    b_eff = bias + t * jnp.sum(w_oihw[:, 0, :, :], axis=(1, 2))          # [Cout]
    b2d = b_eff.reshape(Cout, 1).astype(jnp.float32)

    # Per-tap weights (t channel dropped): [KH*KW, Cout, Cin], tap = kh*KW+kw.
    w_taps = jnp.transpose(w_oihw[:, 1:, :, :], (2, 3, 0, 1))
    w_taps = w_taps.reshape(KH * KW, Cout, Cin).astype(compute_dtype)

    # Flatten each image to [Cin, H*W] and zero-pad the lane dim to IW.
    # This is the only wrapper-side copy of x (~1.3x of x, vs 9x before).
    xf = x_nchw.reshape(N, Cin, HW).astype(compute_dtype)
    xf = jnp.pad(xf, ((0, 0), (0, 0), (0, IW - HW)))

    # ---- images per grid step: fatter blocks to amortize the ~0.35us/step
    # overhead, but keep >= 2 steps (v7x megacore) and << 64 MiB VMEM. --------
    x_img_bytes = Cin * IW * itemsize
    out_img_bytes = Cout * OW * jnp.dtype(out_dtype).itemsize
    nb = 1
    for cand in range(1, N + 1):
        if N % cand:
            continue
        if cand * (x_img_bytes + out_img_bytes) > (2 << 20):   # ~2 MiB / step
            break
        if N // cand >= 2:
            nb = cand

    shifts = [kh * W + kw for kh in range(KH) for kw in range(KW)]

    def kernel(x_ref, w_ref, b_ref, o_ref):
        # x_ref: [nb, Cin, IW]      flattened, zero-tail-padded images
        # w_ref: [KH*KW, Cout, Cin] per-tap weights (constant block)
        # b_ref: [Cout, 1]          bias with the folded t contribution
        # o_ref: [nb, Cout, OW]     lane-dense output pixels
        bias_v = b_ref[...]
        for b in range(nb):
            acc = jnp.zeros((Cout, OW), jnp.float32)
            for tap, s in enumerate(shifts):
                # Tap (kh, kw) of the valid conv is a pure lane shift of the
                # flattened image: in-kernel im2col without any HBM slab.
                acc += jnp.dot(w_ref[tap], x_ref[b, :, s:s + OW],
                               preferred_element_type=jnp.float32)
            o_ref[b] = (acc + bias_v).astype(o_ref.dtype)

    grid = (N // nb,)
    w_bytes = w_taps.size * itemsize + Cout * 4
    step_bytes = 2 * nb * (x_img_bytes + out_img_bytes) + 2 * w_bytes
    vmem_limit = int(min(max(4 * step_bytes, 8 << 20), 48 << 20))  # v7x-safe

    flops = 2 * N * Cout * Cin * KH * KW * Ho * Wo
    bytes_accessed = (xf.size * itemsize + w_taps.size * itemsize + Cout * 4
                      + N * Cout * OW * jnp.dtype(out_dtype).itemsize)

    out = pl.pallas_call(
        kernel,
        out_shape=jax.ShapeDtypeStruct((N, Cout, OW), out_dtype),
        grid=grid,
        in_specs=[
            pl.BlockSpec((nb, Cin, IW), lambda g: (g, 0, 0)),
            pl.BlockSpec((KH * KW, Cout, Cin), lambda g: (0, 0, 0)),
            pl.BlockSpec((Cout, 1), lambda g: (0, 0)),
        ],
        out_specs=pl.BlockSpec((nb, Cout, OW), lambda g: (g, 0, 0)),
        compiler_params=pltpu.CompilerParams(
            dimension_semantics=("parallel",),
            vmem_limit_bytes=vmem_limit),
        cost_estimate=pl.CostEstimate(flops=flops, transcendentals=0,
                                      bytes_accessed=bytes_accessed),
    )(xf, w_taps, b2d)

    # [N, Cout, OW] -> NCHW valid-conv output (no transposes anywhere).
    if OW != HW:
        out = out[:, :, :HW]
    return out.reshape(N, Cout, H, W)[:, :, :Ho, :Wo]


if __name__ == "__main__":
    key = jax.random.PRNGKey(0)
    k_x, k_w, k_b = jax.random.split(key, 3)

    # Small shapes: batch=2, dim_in=4, spatial=16x16, dim_out=8, ksize=3.
    N, Cin, H, W = 2, 4, 16, 16
    Cout, K = 8, 3

    x = jax.random.normal(k_x, (N, Cin, H, W), jnp.float32)
    t = jnp.float32(0.5)
    # Conv2d(dim_in + 1, dim_out, 3) parameter shapes.
    w = jax.random.normal(k_w, (Cout, Cin + 1, K, K), jnp.float32) * 0.1
    b = jax.random.normal(k_b, (Cout,), jnp.float32) * 0.1

    out = concat_conv2d(t, x, w, b, ksize=K)
    out = jax.block_until_ready(out)

    # Reference: XLA conv on the concatenated input (PyTorch Conv2d semantics).
    tt = jnp.ones((N, 1, H, W), jnp.float32) * t
    ttx = jnp.concatenate([tt, x], axis=1)
    ref = jax.lax.conv_general_dilated(
        ttx, w, window_strides=(1, 1), padding="VALID",
        dimension_numbers=("NCHW", "OIHW", "NCHW"),
    ) + b.reshape(1, Cout, 1, 1)

    assert out.shape == (N, Cout, H - K + 1, W - K + 1)
    assert jnp.allclose(out, ref, atol=1e-4, rtol=1e-4)
    print("KERNEL_OK")
</pallas_src>

<mosaic_0001>
module attributes {stable_mosaic.version = 11 : i64} {
  func.func @kernel(%arg0: i32, %arg1: memref<1x4x384xf32, #tpu.memory_space<vmem>>, %arg2: memref<9x8x4xf32, #tpu.memory_space<vmem>>, %arg3: memref<8x1xf32, #tpu.memory_space<vmem>>, %arg4: memref<1x8x256xf32, #tpu.memory_space<vmem>>) attributes {dimension_semantics = [#tpu.dimension_semantics<parallel>], iteration_bounds = array<i64: 2>, scalar_prefetch = 0 : i64, scratch_operands = 0 : i64, tpu.core_type = #tpu.core_type<tc>, window_params = [{transform_indices = @transform_0, window_bounds = array<i64: 1, 4, 384>}, {pipeline_mode = #tpu.pipeline_mode<synchronous>, transform_indices = @transform_1, window_bounds = array<i64: 9, 8, 4>}, {pipeline_mode = #tpu.pipeline_mode<synchronous>, transform_indices = @transform_2, window_bounds = array<i64: 8, 1>}, {transform_indices = @transform_3, window_bounds = array<i64: 1, 8, 256>}]} {
    %c0 = arith.constant 0 : index
    %c0_0 = arith.constant 0 : index
    %0 = vector.load %arg3[%c0, %c0_0] : memref<8x1xf32, #tpu.memory_space<vmem>>, vector<8x1xf32>
    %cst = arith.constant 0.000000e+00 : f32
    %1 = vector.broadcast %cst : f32 to vector<8x256xf32>
    %c0_1 = arith.constant 0 : index
    %c0_2 = arith.constant 0 : index
    %c0_3 = arith.constant 0 : index
    %2 = vector.load %arg2[%c0_1, %c0_2, %c0_3] : memref<9x8x4xf32, #tpu.memory_space<vmem>>, vector<1x8x4xf32>
    %3 = vector.shape_cast %2 : vector<1x8x4xf32> to vector<8x4xf32>
    %c0_4 = arith.constant 0 : index
    %c0_5 = arith.constant 0 : index
    %c0_6 = arith.constant 0 : index
    %4 = vector.load %arg1[%c0_4, %c0_5, %c0_6] : memref<1x4x384xf32, #tpu.memory_space<vmem>>, vector<1x4x256xf32>
    %5 = vector.shape_cast %4 : vector<1x4x256xf32> to vector<4x256xf32>
    %cst_7 = arith.constant dense<0.000000e+00> : vector<8x256xf32>
    %6 = tpu.matmul %3, %5, %cst_7 {dimension_numbers = #tpu.dot_dimension_numbers<[1], [0], [0], [1], [0, 0, 1, 1], [], []>} : vector<8x4xf32>, vector<4x256xf32>, vector<8x256xf32> -> vector<8x256xf32>
    %7 = arith.addf %1, %6 : vector<8x256xf32>
    %c1 = arith.constant 1 : index
    %c0_8 = arith.constant 0 : index
    %c0_9 = arith.constant 0 : index
    %8 = vector.load %arg2[%c1, %c0_8, %c0_9] : memref<9x8x4xf32, #tpu.memory_space<vmem>>, vector<1x8x4xf32>
    %9 = vector.shape_cast %8 : vector<1x8x4xf32> to vector<8x4xf32>
    %c0_10 = arith.constant 0 : index
    %c0_11 = arith.constant 0 : index
    %c1_12 = arith.constant 1 : index
    %10 = vector.load %arg1[%c0_10, %c0_11, %c1_12] : memref<1x4x384xf32, #tpu.memory_space<vmem>>, vector<1x4x256xf32>
    %11 = vector.shape_cast %10 : vector<1x4x256xf32> to vector<4x256xf32>
    %cst_13 = arith.constant dense<0.000000e+00> : vector<8x256xf32>
    %12 = tpu.matmul %9, %11, %cst_13 {dimension_numbers = #tpu.dot_dimension_numbers<[1], [0], [0], [1], [0, 0, 1, 1], [], []>} : vector<8x4xf32>, vector<4x256xf32>, vector<8x256xf32> -> vector<8x256xf32>
    %13 = arith.addf %7, %12 : vector<8x256xf32>
    %c2 = arith.constant 2 : index
    %c0_14 = arith.constant 0 : index
    %c0_15 = arith.constant 0 : index
    %14 = vector.load %arg2[%c2, %c0_14, %c0_15] : memref<9x8x4xf32, #tpu.memory_space<vmem>>, vector<1x8x4xf32>
    %15 = vector.shape_cast %14 : vector<1x8x4xf32> to vector<8x4xf32>
    %c0_16 = arith.constant 0 : index
    %c0_17 = arith.constant 0 : index
    %c2_18 = arith.constant 2 : index
    %16 = vector.load %arg1[%c0_16, %c0_17, %c2_18] : memref<1x4x384xf32, #tpu.memory_space<vmem>>, vector<1x4x256xf32>
    %17 = vector.shape_cast %16 : vector<1x4x256xf32> to vector<4x256xf32>
    %cst_19 = arith.constant dense<0.000000e+00> : vector<8x256xf32>
    %18 = tpu.matmul %15, %17, %cst_19 {dimension_numbers = #tpu.dot_dimension_numbers<[1], [0], [0], [1], [0, 0, 1, 1], [], []>} : vector<8x4xf32>, vector<4x256xf32>, vector<8x256xf32> -> vector<8x256xf32>
    %19 = arith.addf %13, %18 : vector<8x256xf32>
    %c3 = arith.constant 3 : index
    %c0_20 = arith.constant 0 : index
    %c0_21 = arith.constant 0 : index
    %20 = vector.load %arg2[%c3, %c0_20, %c0_21] : memref<9x8x4xf32, #tpu.memory_space<vmem>>, vector<1x8x4xf32>
    %21 = vector.shape_cast %20 : vector<1x8x4xf32> to vector<8x4xf32>
    %c0_22 = arith.constant 0 : index
    %c0_23 = arith.constant 0 : index
    %c16 = arith.constant 16 : index
    %22 = vector.load %arg1[%c0_22, %c0_23, %c16] : memref<1x4x384xf32, #tpu.memory_space<vmem>>, vector<1x4x256xf32>
    %23 = vector.shape_cast %22 : vector<1x4x256xf32> to vector<4x256xf32>
    %cst_24 = arith.constant dense<0.000000e+00> : vector<8x256xf32>
    %24 = tpu.matmul %21, %23, %cst_24 {dimension_numbers = #tpu.dot_dimension_numbers<[1], [0], [0], [1], [0, 0, 1, 1], [], []>} : vector<8x4xf32>, vector<4x256xf32>, vector<8x256xf32> -> vector<8x256xf32>
    %25 = arith.addf %19, %24 : vector<8x256xf32>
    %c4 = arith.constant 4 : index
    %c0_25 = arith.constant 0 : index
    %c0_26 = arith.constant 0 : index
    %26 = vector.load %arg2[%c4, %c0_25, %c0_26] : memref<9x8x4xf32, #tpu.memory_space<vmem>>, vector<1x8x4xf32>
    %27 = vector.shape_cast %26 : vector<1x8x4xf32> to vector<8x4xf32>
    %c0_27 = arith.constant 0 : index
    %c0_28 = arith.constant 0 : index
    %c17 = arith.constant 17 : index
    %28 = vector.load %arg1[%c0_27, %c0_28, %c17] : memref<1x4x384xf32, #tpu.memory_space<vmem>>, vector<1x4x256xf32>
    %29 = vector.shape_cast %28 : vector<1x4x256xf32> to vector<4x256xf32>
    %cst_29 = arith.constant dense<0.000000e+00> : vector<8x256xf32>
    %30 = tpu.matmul %27, %29, %cst_29 {dimension_numbers = #tpu.dot_dimension_numbers<[1], [0], [0], [1], [0, 0, 1, 1], [], []>} : vector<8x4xf32>, vector<4x256xf32>, vector<8x256xf32> -> vector<8x256xf32>
    %31 = arith.addf %25, %30 : vector<8x256xf32>
    %c5 = arith.constant 5 : index
    %c0_30 = arith.constant 0 : index
    %c0_31 = arith.constant 0 : index
    %32 = vector.load %arg2[%c5, %c0_30, %c0_31] : memref<9x8x4xf32, #tpu.memory_space<vmem>>, vector<1x8x4xf32>
    %33 = vector.shape_cast %32 : vector<1x8x4xf32> to vector<8x4xf32>
    %c0_32 = arith.constant 0 : index
    %c0_33 = arith.constant 0 : index
    %c18 = arith.constant 18 : index
    %34 = vector.load %arg1[%c0_32, %c0_33, %c18] : memref<1x4x384xf32, #tpu.memory_space<vmem>>, vector<1x4x256xf32>
    %35 = vector.shape_cast %34 : vector<1x4x256xf32> to vector<4x256xf32>
    %cst_34 = arith.constant dense<0.000000e+00> : vector<8x256xf32>
    %36 = tpu.matmul %33, %35, %cst_34 {dimension_numbers = #tpu.dot_dimension_numbers<[1], [0], [0], [1], [0, 0, 1, 1], [], []>} : vector<8x4xf32>, vector<4x256xf32>, vector<8x256xf32> -> vector<8x256xf32>
    %37 = arith.addf %31, %36 : vector<8x256xf32>
    %c6 = arith.constant 6 : index
    %c0_35 = arith.constant 0 : index
    %c0_36 = arith.constant 0 : index
    %38 = vector.load %arg2[%c6, %c0_35, %c0_36] : memref<9x8x4xf32, #tpu.memory_space<vmem>>, vector<1x8x4xf32>
    %39 = vector.shape_cast %38 : vector<1x8x4xf32> to vector<8x4xf32>
    %c0_37 = arith.constant 0 : index
    %c0_38 = arith.constant 0 : index
    %c32 = arith.constant 32 : index
    %40 = vector.load %arg1[%c0_37, %c0_38, %c32] : memref<1x4x384xf32, #tpu.memory_space<vmem>>, vector<1x4x256xf32>
    %41 = vector.shape_cast %40 : vector<1x4x256xf32> to vector<4x256xf32>
    %cst_39 = arith.constant dense<0.000000e+00> : vector<8x256xf32>
    %42 = tpu.matmul %39, %41, %cst_39 {dimension_numbers = #tpu.dot_dimension_numbers<[1], [0], [0], [1], [0, 0, 1, 1], [], []>} : vector<8x4xf32>, vector<4x256xf32>, vector<8x256xf32> -> vector<8x256xf32>
    %43 = arith.addf %37, %42 : vector<8x256xf32>
    %c7 = arith.constant 7 : index
    %c0_40 = arith.constant 0 : index
    %c0_41 = arith.constant 0 : index
    %44 = vector.load %arg2[%c7, %c0_40, %c0_41] : memref<9x8x4xf32, #tpu.memory_space<vmem>>, vector<1x8x4xf32>
    %45 = vector.shape_cast %44 : vector<1x8x4xf32> to vector<8x4xf32>
    %c0_42 = arith.constant 0 : index
    %c0_43 = arith.constant 0 : index
    %c33 = arith.constant 33 : index
    %46 = vector.load %arg1[%c0_42, %c0_43, %c33] : memref<1x4x384xf32, #tpu.memory_space<vmem>>, vector<1x4x256xf32>
    %47 = vector.shape_cast %46 : vector<1x4x256xf32> to vector<4x256xf32>
    %cst_44 = arith.constant dense<0.000000e+00> : vector<8x256xf32>
    %48 = tpu.matmul %45, %47, %cst_44 {dimension_numbers = #tpu.dot_dimension_numbers<[1], [0], [0], [1], [0, 0, 1, 1], [], []>} : vector<8x4xf32>, vector<4x256xf32>, vector<8x256xf32> -> vector<8x256xf32>
    %49 = arith.addf %43, %48 : vector<8x256xf32>
    %c8 = arith.constant 8 : index
    %c0_45 = arith.constant 0 : index
    %c0_46 = arith.constant 0 : index
    %50 = vector.load %arg2[%c8, %c0_45, %c0_46] : memref<9x8x4xf32, #tpu.memory_space<vmem>>, vector<1x8x4xf32>
    %51 = vector.shape_cast %50 : vector<1x8x4xf32> to vector<8x4xf32>
    %c0_47 = arith.constant 0 : index
    %c0_48 = arith.constant 0 : index
    %c34 = arith.constant 34 : index
    %52 = vector.load %arg1[%c0_47, %c0_48, %c34] : memref<1x4x384xf32, #tpu.memory_space<vmem>>, vector<1x4x256xf32>
    %53 = vector.shape_cast %52 : vector<1x4x256xf32> to vector<4x256xf32>
    %cst_49 = arith.constant dense<0.000000e+00> : vector<8x256xf32>
    %54 = tpu.matmul %51, %53, %cst_49 {dimension_numbers = #tpu.dot_dimension_numbers<[1], [0], [0], [1], [0, 0, 1, 1], [], []>} : vector<8x4xf32>, vector<4x256xf32>, vector<8x256xf32> -> vector<8x256xf32>
    %55 = arith.addf %49, %54 : vector<8x256xf32>
    %56 = vector.broadcast %0 : vector<8x1xf32> to vector<8x256xf32>
    %57 = arith.addf %55, %56 : vector<8x256xf32>
    %c0_50 = arith.constant 0 : index
    %c0_51 = arith.constant 0 : index
    %c0_52 = arith.constant 0 : index
    %58 = vector.load %arg4[%c0_50, %c0_51, %c0_52] : memref<1x8x256xf32, #tpu.memory_space<vmem>>, vector<1x8x256xf32>
    %59 = vector.shape_cast %58 : vector<1x8x256xf32> to vector<8x256xf32>
    %60 = vector.shape_cast %57 : vector<8x256xf32> to vector<1x8x256xf32>
    tpu.vector_store %arg4[%c0_50, %c0_51, %c0_52], %60 {strides = array<i32>} : memref<1x8x256xf32, #tpu.memory_space<vmem>>, vector<1x8x256xf32>,
    return
  }
  func.func @transform_0(%arg0: i32) -> (i32, i32, i32) {
    %c0_i32 = arith.constant 0 : i32
    %c0_i32_0 = arith.constant 0 : i32
    %c0_i32_1 = arith.constant 0 : i32
    return %arg0, %c0_i32, %c0_i32_0 : i32, i32, i32
  }
  func.func @transform_1(%arg0: i32) -> (i32, i32, i32) {
    %c0_i32 = arith.constant 0 : i32
    %c0_i32_0 = arith.constant 0 : i32
    %c0_i32_1 = arith.constant 0 : i32
    %c0_i32_2 = arith.constant 0 : i32
    return %c0_i32, %c0_i32_0, %c0_i32_1 : i32, i32, i32
  }
  func.func @transform_2(%arg0: i32) -> (i32, i32) {
    %c0_i32 = arith.constant 0 : i32
    %c0_i32_0 = arith.constant 0 : i32
    %c0_i32_1 = arith.constant 0 : i32
    return %c0_i32, %c0_i32_0 : i32, i32
  }
  func.func @transform_3(%arg0: i32) -> (i32, i32, i32) {
    %c0_i32 = arith.constant 0 : i32
    %c0_i32_0 = arith.constant 0 : i32
    %c0_i32_1 = arith.constant 0 : i32
    return %arg0, %c0_i32, %c0_i32_0 : i32, i32, i32
  }
}

</mosaic_0001>

<llo_original>
// kernel: tpu_custom_call.1
$region0: #{tpu_custom_call.1}
  #allocation0 [shape = 'u32[]', space=smem, size = 0x4, offset = 0x4, fixed_abs, tag = 'smem constant byte address 0x4 - core index']
  #allocation1 [shape = 'u32[144,128]{1,0:T(1,128)}', space=vmem, size = 0x12000, scoped, tag = 'internal scratch']
  %s0 = inlined_call_operand.vmem [shape: f32[2,4,384], index: 0, kind: input, shape index: {}]
  %s1 = inlined_call_operand.vmem [shape: f32[9,8,4], index: 1, kind: input, shape index: {}]
  %s2 = inlined_call_operand.vmem [shape: f32[8,1], index: 2, kind: input, shape index: {}]
  %s3 = inlined_call_operand.hbm [shape: f32[2,8,256], index: 3, kind: output, shape index: {}]
  %s4 = sld [smem:[#allocation0]]
  $region45: #{tpu_custom_call.1} parent=0
    _
  %s6 = ssub.s32 1, %s4
  %s7 = scalar_select 0, %s6, %s4
  $region1: #{tpu_custom_call.1} parent=0
    #allocation2 [shape = 'u8[16384]{0}', space=vmem, size = 0x4000, scoped, tag = 'output window, operand 0']
    #allocation3 [shape = 's32[2]{0}', space=sflag, size = 0x8, scoped, tag = 'scoped memory for tpu_custom_call.1']
    %8 = vsyncpa [#allocation3], 0
    %s9 = scalar_lea.sflag [#allocation3], 1
    %10 = vsyncpa %s9, 0
    loop: start=0, step=1, limit=4
    $region2: #{tpu_custom_call.1} parent=1 // loop_pre_header
      _
    $region3: #{tpu_custom_call.1} parent=1 // loop_header
      %s12 = sphi 0, %s16
      %p13 = scmp.ge.s32.totalorder %s12, 4
      %s22 = sphi 0, %s24
      %s25 = sphi 0, %s22
      %s26 = sphi 0, %s25
      %s42 = sphi 0, %s26
      %s46 = sphi 0, %s46
      %s48 = sphi 0, %s46
      %s49 = sphi 0, %s48
      %s63 = sphi 0, %s49
      %s67 = sphi 0, %s67
      %s69 = sphi 0, %s67
      %s70 = sphi 0, %s69
      %s84 = sphi 0, %s70
      %s90 = sphi 0, %s92
      %s93 = sphi 0, %s90
      %s94 = sphi 0, %s93
      %s110 = sphi 0, %s94
    $region4: #{tpu_custom_call.1} parent=1 // loop_header_branch
      %15 = sbr.rel (%p13) target = $region8
    $region5: #{tpu_custom_call.1} parent=1 // loop_body
      %s17 = ssub.s32 %s12, 1
      %s18 = ssub.s32 %s12, 2
      %s19 = sadd.s32 %s12, 1
      %s20 = ssub.s32 %s12, %s19
      %p21 = scmp.eq.s32.totalorder %s20, 0
      %s23 = sadd.s32 %s22, 1
      %s24 = scalar_select %p21, %s22, %s23
      %p27 = pneg %p21
      %p28 = scmp.eq.s32.totalorder %s12, 1
      %p29 = por %p27, %p28
      %p30 = scmp.ne.s32.totalorder %s22, %s25
      %p31 = scmp.eq.s32.totalorder %s12, 0
      %p32 = por %p30, %p31
      %p33 = scmp.ne.s32.totalorder %s22, %s25
      %p34 = scmp.eq.s32.totalorder %s17, 1
      %p35 = por %p33, %p34
      %p36 = scmp.ne.s32.totalorder %s25, %s26
      %p37 = scmp.eq.s32.totalorder %s17, 0
      %p38 = por %p36, %p37
      %p39 = scmp.ne.s32.totalorder %s25, %s26
      %p40 = scmp.eq.s32.totalorder %s18, 1
      %p41 = por %p39, %p40
      %p43 = scmp.ne.s32.totalorder %s26, %s42
      %p44 = scmp.eq.s32.totalorder %s18, 0
      %p45 = por %p43, %p44
      %s47 = sadd.s32 %s46, 1
      %p50 = scmp.eq.s32.totalorder %s12, 1
      %p51 = scmp.ne.s32.totalorder %s46, %s48
      %p52 = scmp.eq.s32.totalorder %s12, 0
      %p53 = por %p51, %p52
      %p54 = scmp.ne.s32.totalorder %s46, %s48
      %p55 = scmp.eq.s32.totalorder %s17, 1
      %p56 = por %p54, %p55
      %p57 = scmp.ne.s32.totalorder %s48, %s49
      %p58 = scmp.eq.s32.totalorder %s17, 0
      %p59 = por %p57, %p58
      %p60 = scmp.ne.s32.totalorder %s48, %s49
      %p61 = scmp.eq.s32.totalorder %s18, 1
      %p62 = por %p60, %p61
      %p64 = scmp.ne.s32.totalorder %s49, %s63
      %p65 = scmp.eq.s32.totalorder %s18, 0
      %p66 = por %p64, %p65
      %s68 = sadd.s32 %s67, 1
      %p71 = scmp.eq.s32.totalorder %s12, 1
      %p72 = scmp.ne.s32.totalorder %s67, %s69
      %p73 = scmp.eq.s32.totalorder %s12, 0
      %p74 = por %p72, %p73
      %p75 = scmp.ne.s32.totalorder %s67, %s69
      %p76 = scmp.eq.s32.totalorder %s17, 1
      %p77 = por %p75, %p76
      %p78 = scmp.ne.s32.totalorder %s69, %s70
      %p79 = scmp.eq.s32.totalorder %s17, 0
      %p80 = por %p78, %p79
      %p81 = scmp.ne.s32.totalorder %s69, %s70
      %p82 = scmp.eq.s32.totalorder %s18, 1
      %p83 = por %p81, %p82
      %p85 = scmp.ne.s32.totalorder %s70, %s84
      %p86 = scmp.eq.s32.totalorder %s18, 0
      %p87 = por %p85, %p86
      %s88 = ssub.s32 %s12, %s19
      %p89 = scmp.eq.s32.totalorder %s88, 0
      %s91 = sadd.s32 %s90, 1
      %s92 = scalar_select %p89, %s90, %s91
      %p95 = pneg %p89
      %p96 = scmp.eq.s32.totalorder %s12, 1
      %p97 = por %p95, %p96
      %p98 = scmp.ne.s32.totalorder %s90, %s93
      %p99 = scmp.eq.s32.totalorder %s12, 0
      %p100 = por %p98, %p99
      %p101 = scmp.ne.s32.totalorder %s90, %s93
      %p102 = scmp.eq.s32.totalorder %s17, 1
      %p103 = por %p101, %p102
      %p104 = scmp.ne.s32.totalorder %s93, %s94
      %p105 = scmp.eq.s32.totalorder %s17, 0
      %p106 = por %p104, %p105
      %p107 = scmp.ne.s32.totalorder %s93, %s94
      %p108 = scmp.eq.s32.totalorder %s18, 1
      %p109 = por %p107, %p108
      %p111 = scmp.ne.s32.totalorder %s94, %s110
      %p112 = scmp.eq.s32.totalorder %s18, 0
      %p113 = por %p111, %p112
      %p114 = scmp.le.s32.totalorder 1, %s12
      %p115 = scmp.lt.s32.totalorder %s12, 3
      %p116 = pnand %p114, %p115
      %p117 = pneg %p116
      // Predicated region
      $region9: #{tpu_custom_call.1} parent=5 // pred_check
        _
      $region10: #{tpu_custom_call.1} parent=5 // pred_check_branch
        %119 = sbr.rel (%p116) target = $region12
      $region11: #{tpu_custom_call.1} parent=5 // pred_region
        %s120 = ssub.s32 %s12, 1
        // Predicated region
        $region13: #{tpu_custom_call.1} parent=11 // pred_check
          %p121 = pneg %p59
        $region14: #{tpu_custom_call.1} parent=11 // pred_check_branch
          %123 = sbr.rel (%p121) target = $region16
        $region15: #{tpu_custom_call.1} parent=11 // pred_region
          _
        $region16: #{tpu_custom_call.1} parent=11 // pred_fallthru
          _
        // Predicated region
        $region17: #{tpu_custom_call.1} parent=11 // pred_check
          %p124 = pneg %p80
        $region18: #{tpu_custom_call.1} parent=11 // pred_check_branch
          %126 = sbr.rel (%p124) target = $region20
        $region19: #{tpu_custom_call.1} parent=11 // pred_region
          _
        $region20: #{tpu_custom_call.1} parent=11 // pred_fallthru
          _
      $region12: #{tpu_custom_call.1} parent=5 // pred_fallthru
        _
      %p127 = scmp.lt.s32.totalorder %s12, 2
      // Predicated region
      $region21: #{tpu_custom_call.1} parent=5 // pred_check
        %p128 = pneg %p127
      $region22: #{tpu_custom_call.1} parent=5 // pred_check_branch
        %130 = sbr.rel (%p128) target = $region24
      $region23: #{tpu_custom_call.1} parent=5 // pred_region
        // Predicated region
        $region25: #{tpu_custom_call.1} parent=23 // pred_check
          %p131 = pneg %p32
        $region26: #{tpu_custom_call.1} parent=23 // pred_check_branch
          %133 = sbr.rel (%p131) target = $region28
        $region27: #{tpu_custom_call.1} parent=23 // pred_region
          %p134 = scmp.lt.s32.totalorder %s12, 1
          %s135 = scalar_select %p134, %s12, 1
          %s136 = smul.addr %s135, 3
          %s137 = smul.addr %s136, 4
          %s138 = scalar_lea.vmem %s0, %s137
        $region28: #{tpu_custom_call.1} parent=23 // pred_fallthru
          _
      $region24: #{tpu_custom_call.1} parent=5 // pred_fallthru
        _
      %p139 = scmp.le.s32.totalorder 1, %s12
      %p140 = scmp.lt.s32.totalorder %s12, 3
      %p141 = pnand %p139, %p140
      %p142 = pneg %p141
      // Predicated region
      $region29: #{tpu_custom_call.1} parent=5 // pred_check
        _
      $region30: #{tpu_custom_call.1} parent=5 // pred_check_branch
        %144 = sbr.rel (%p141) target = $region32
      $region31: #{tpu_custom_call.1} parent=5 // pred_region
        %s145 = ssub.s32 %s12, 1
        %p146 = scmp.lt.s32.totalorder %s17, 1
        %s147 = scalar_select %p146, %s17, 1
        %s148 = smul.addr %s147, 3
        %s149 = smul.addr %s148, 4
        %s150 = scalar_lea.vmem %s0, %s149
        %p151 = pneg %p38
        %p152 = pneg %p35
        %p153 = pneg %p59
        %p154 = pneg %p56
        %p155 = pneg %p80
        %p156 = pneg %p77
        %p157 = pneg %p106
        %p158 = pneg %p103
        %s159 = sand.u32 %s93, 1
        %s160 = scalar_lea.sflag [#allocation3], %s159
        %s161 = sand.u32 %s93, 1
        %s162 = smul.addr %s161, 16
        %s163 = scalar_lea.vmem [#allocation2], %s162
        %p164 = scmp.lt.s32.totalorder %s17, 1
        %s165 = scalar_select %p164, %s17, 1
        %s166 = smul.addr %s165, 3
        %s167 = smul.addr %s166, 4
        %s168 = scalar_lea.vmem %s0, %s167
        %v169 = vld [vmem:[%s2] sm:$0xff]
        %v170 = vld [vmem:[%s1] sm:$0xff]
        %v171 = vld [vmem:[%s168] sm:$0xff]
        %s172 = scalar_lea.vmem %s1, 8
        %v173 = vld [vmem:[%s172] sm:$0xff]
        %v174 = vld [vmem:[%s168] sm:$0xff]
        %v175 = vld [vmem:[%s168 + $0x8] sm:$0xf]
        %v178 = vcombine.high %v174, %v174
        %179 = vrot.lane.b32.xlu0 %v174, 127
        %v180 = vpop.permute.xlu0 %179
        %181 = vrot.lane.b32.xlu0 %v178, 127
        %v182 = vpop.permute.xlu0 %181
        %183 = vrot.lane.b32.xlu0 %v175, 127
        %v184 = vpop.permute.xlu0 %183
        %vm185 = vcmask 1039360
        %v186 = vsel %vm185, %v180, %v182
        %v187 = vsel %vm185, %v182, %v184
        %vm188 = vcmask 31744
        %v190 = vsel %vm188, %v173, 0
        %vm192 = vcmask 1043456
        %v193 = vsel %vm192, %v186, 0
        %v195 = vsel %vm192, %v187, 0
        %197 = vmatprep.subr.mxu0 %v195
        %198 = vmatpush1.msra.mxu0 %v193
        %199 = vmatprep.subr.mxu0 0.0
        %200 = vmatpush1.msra.mxu0 0.0
        %201 = vmatprep.subr.mxu0 0.0
        %202 = vmatpush1.msra.mxu0 0.0
        %203 = vmatprep.subr.mxu0 0.0
        %204 = vmatpush1.msra.mxu0 0.0
        %205 = vmatprep.subr.mxu0 0.0
        %206 = vmatpush1.msra.mxu0 0.0
        %207 = vmatprep.subr.mxu0 0.0
        %208 = vmatpush1.msra.mxu0 0.0
        %209 = vmatprep.subr.mxu0 0.0
        %210 = vmatpush1.msra.mxu0 0.0
        %211 = vmatprep.subr.mxu0 0.0
        %212 = vmatpush1.msra.mxu0 0.0
        %213 = vmatprep.subr.mxu0 0.0
        %214 = vmatpush1.msra.mxu0 0.0
        %215 = vmatprep.subr.mxu0 0.0
        %216 = vmatpush1.msra.mxu0 0.0
        %217 = vmatprep.subr.mxu0 0.0
        %218 = vmatpush1.msra.mxu0 0.0
        %219 = vmatprep.subr.mxu0 0.0
        %220 = vmatpush1.msra.mxu0 0.0
        %221 = vmatprep.subr.mxu0 0.0
        %222 = vmatpush1.msra.mxu0 0.0
        %223 = vmatprep.subr.mxu0 0.0
        %224 = vmatpush1.msra.mxu0 0.0
        %225 = vmatprep.subr.mxu0 0.0
        %226 = vmatpush1.msra.mxu0 0.0
        %227 = vmatprep.subr.mxu0 0.0
        %228 = vmatpush1.msra.mxu0 0.0
        %229 = vmatprep.subr.mxu0 0.0
        %230 = vmatpush1.msra.mxu0 0.0
        %231 = vmatprep.subr.mxu0 0.0
        %232 = vmatpush1.msra.mxu0 0.0
        %233 = vmatprep.subr.mxu0 0.0
        %234 = vmatpush1.msra.mxu0 0.0
        %235 = vmatprep.subr.mxu0 0.0
        %236 = vmatpush1.msra.mxu0 0.0
        %237 = vmatprep.subr.mxu0 0.0
        %238 = vmatpush1.msra.mxu0 0.0
        %239 = vmatprep.subr.mxu0 0.0
        %240 = vmatpush1.msra.mxu0 0.0
        %241 = vmatprep.subr.mxu0 0.0
        %242 = vmatpush1.msra.mxu0 0.0
        %243 = vmatprep.subr.mxu0 0.0
        %244 = vmatpush1.msra.mxu0 0.0
        %245 = vmatprep.subr.mxu0 0.0
        %246 = vmatpush1.msra.mxu0 0.0
        %247 = vmatprep.subr.mxu0 0.0
        %248 = vmatpush1.msra.mxu0 0.0
        %249 = vmatprep.subr.mxu0 0.0
        %250 = vmatpush1.msra.mxu0 0.0
        %251 = vmatprep.subr.mxu0 0.0
        %252 = vmatpush1.msra.mxu0 0.0
        %253 = vmatprep.subr.mxu0 0.0
        %254 = vmatpush1.msra.mxu0 0.0
        %255 = vmatprep.subr.mxu0 0.0
        %256 = vmatpush1.msra.mxu0 0.0
        %257 = vmatprep.subr.mxu0 0.0
        %258 = vmatpush1.msra.mxu0 0.0
        %259 = vmatprep.subr.mxu0 0.0
        %260 = vmatpush1.msra.mxu0 0.0
        %261 = vmatprep.mubr.f32.mxu0 0.0
        %262 = vmatmul.mubr.f32.gmra.mrb[0].mxu0 %v190
        %v263 = vpop.f32.mrb[0].mxu0
        %v264 = vadd.f32 0.0, %v263
        %v265 = vpop.f32.mrb[0].mxu0
        %v266 = vadd.f32 0.0, %v265
        %267 = vdwg.mxu0
        %v269 = vcombine.high %v171, %v171
        %v271 = vsel %vm188, %v170, 0
        %v273 = vsel %vm192, %v171, 0
        %v275 = vsel %vm192, %v269, 0
        %277 = vmatprep.subr.mxu0 %v275
        %278 = vmatpush1.msra.mxu0 %v273
        %279 = vmatprep.subr.mxu0 0.0
        %280 = vmatpush1.msra.mxu0 0.0
        %281 = vmatprep.subr.mxu0 0.0
        %282 = vmatpush1.msra.mxu0 0.0
        %283 = vmatprep.subr.mxu0 0.0
        %284 = vmatpush1.msra.mxu0 0.0
        %285 = vmatprep.subr.mxu0 0.0
        %286 = vmatpush1.msra.mxu0 0.0
        %287 = vmatprep.subr.mxu0 0.0
        %288 = vmatpush1.msra.mxu0 0.0
        %289 = vmatprep.subr.mxu0 0.0
        %290 = vmatpush1.msra.mxu0 0.0
        %291 = vmatprep.subr.mxu0 0.0
        %292 = vmatpush1.msra.mxu0 0.0
        %293 = vmatprep.subr.mxu0 0.0
        %294 = vmatpush1.msra.mxu0 0.0
        %295 = vmatprep.subr.mxu0 0.0
        %296 = vmatpush1.msra.mxu0 0.0
        %297 = vmatprep.subr.mxu0 0.0
        %298 = vmatpush1.msra.mxu0 0.0
        %299 = vmatprep.subr.mxu0 0.0
        %300 = vmatpush1.msra.mxu0 0.0
        %301 = vmatprep.subr.mxu0 0.0
        %302 = vmatpush1.msra.mxu0 0.0
        %303 = vmatprep.subr.mxu0 0.0
        %304 = vmatpush1.msra.mxu0 0.0
        %305 = vmatprep.subr.mxu0 0.0
        %306 = vmatpush1.msra.mxu0 0.0
        %307 = vmatprep.subr.mxu0 0.0
        %308 = vmatpush1.msra.mxu0 0.0
        %309 = vmatprep.subr.mxu0 0.0
        %310 = vmatpush1.msra.mxu0 0.0
        %311 = vmatprep.subr.mxu0 0.0
        %312 = vmatpush1.msra.mxu0 0.0
        %313 = vmatprep.subr.mxu0 0.0
        %314 = vmatpush1.msra.mxu0 0.0
        %315 = vmatprep.subr.mxu0 0.0
        %316 = vmatpush1.msra.mxu0 0.0
        %317 = vmatprep.subr.mxu0 0.0
        %318 = vmatpush1.msra.mxu0 0.0
        %319 = vmatprep.subr.mxu0 0.0
        %320 = vmatpush1.msra.mxu0 0.0
        %321 = vmatprep.subr.mxu0 0.0
        %322 = vmatpush1.msra.mxu0 0.0
        %323 = vmatprep.subr.mxu0 0.0
        %324 = vmatpush1.msra.mxu0 0.0
        %325 = vmatprep.subr.mxu0 0.0
        %326 = vmatpush1.msra.mxu0 0.0
        %327 = vmatprep.subr.mxu0 0.0
        %328 = vmatpush1.msra.mxu0 0.0
        %329 = vmatprep.subr.mxu0 0.0
        %330 = vmatpush1.msra.mxu0 0.0
        %331 = vmatprep.subr.mxu0 0.0
        %332 = vmatpush1.msra.mxu0 0.0
        %333 = vmatprep.subr.mxu0 0.0
        %334 = vmatpush1.msra.mxu0 0.0
        %335 = vmatprep.subr.mxu0 0.0
        %336 = vmatpush1.msra.mxu0 0.0
        %337 = vmatprep.subr.mxu0 0.0
        %338 = vmatpush1.msra.mxu0 0.0
        %339 = vmatprep.subr.mxu0 0.0
        %340 = vmatpush1.msra.mxu0 0.0
        %341 = vmatprep.mubr.f32.mxu0 0.0
        %342 = vmatmul.mubr.f32.gmra.mrb[0].mxu0 %v271
        %v343 = vpop.f32.mrb[0].mxu0
        %v344 = vadd.f32 %v264, %v343
        %v345 = vpop.f32.mrb[0].mxu0
        %v346 = vadd.f32 %v266, %v345
        %347 = vdwg.mxu0
        %s348 = scalar_lea.vmem %s1, 16
        %v349 = vld [vmem:[%s348] sm:$0xff]
        %v350 = vld [vmem:[%s168] sm:$0xff]
        %v351 = vld [vmem:[%s168 + $0x8] sm:$0xf]
        %v354 = vcombine.high %v350, %v350
        %355 = vrot.lane.b32.xlu0 %v350, 126
        %v356 = vpop.permute.xlu0 %355
        %357 = vrot.lane.b32.xlu0 %v354, 126
        %v358 = vpop.permute.xlu0 %357
        %359 = vrot.lane.b32.xlu0 %v351, 126
        %v360 = vpop.permute.xlu0 %359
        %vm361 = vcmask 1031168
        %v362 = vsel %vm361, %v356, %v358
        %v363 = vsel %vm361, %v358, %v360
        %v365 = vsel %vm188, %v349, 0
        %v367 = vsel %vm192, %v362, 0
        %v369 = vsel %vm192, %v363, 0
        %371 = vmatprep.subr.mxu0 %v369
        %372 = vmatpush1.msra.mxu0 %v367
        %373 = vmatprep.subr.mxu0 0.0
        %374 = vmatpush1.msra.mxu0 0.0
        %375 = vmatprep.subr.mxu0 0.0
        %376 = vmatpush1.msra.mxu0 0.0
        %377 = vmatprep.subr.mxu0 0.0
        %378 = vmatpush1.msra.mxu0 0.0
        %379 = vmatprep.subr.mxu0 0.0
        %380 = vmatpush1.msra.mxu0 0.0
        %381 = vmatprep.subr.mxu0 0.0
        %382 = vmatpush1.msra.mxu0 0.0
        %383 = vmatprep.subr.mxu0 0.0
        %384 = vmatpush1.msra.mxu0 0.0
        %385 = vmatprep.subr.mxu0 0.0
        %386 = vmatpush1.msra.mxu0 0.0
        %387 = vmatprep.subr.mxu0 0.0
        %388 = vmatpush1.msra.mxu0 0.0
        %389 = vmatprep.subr.mxu0 0.0
        %390 = vmatpush1.msra.mxu0 0.0
        %391 = vmatprep.subr.mxu0 0.0
        %392 = vmatpush1.msra.mxu0 0.0
        %393 = vmatprep.subr.mxu0 0.0
        %394 = vmatpush1.msra.mxu0 0.0
        %395 = vmatprep.subr.mxu0 0.0
        %396 = vmatpush1.msra.mxu0 0.0
        %397 = vmatprep.subr.mxu0 0.0
        %398 = vmatpush1.msra.mxu0 0.0
        %399 = vmatprep.subr.mxu0 0.0
        %400 = vmatpush1.msra.mxu0 0.0
        %401 = vmatprep.subr.mxu0 0.0
        %402 = vmatpush1.msra.mxu0 0.0
        %403 = vmatprep.subr.mxu0 0.0
        %404 = vmatpush1.msra.mxu0 0.0
        %405 = vmatprep.subr.mxu0 0.0
        %406 = vmatpush1.msra.mxu0 0.0
        %407 = vmatprep.subr.mxu0 0.0
        %408 = vmatpush1.msra.mxu0 0.0
        %409 = vmatprep.subr.mxu0 0.0
        %410 = vmatpush1.msra.mxu0 0.0
        %411 = vmatprep.subr.mxu0 0.0
        %412 = vmatpush1.msra.mxu0 0.0
        %413 = vmatprep.subr.mxu0 0.0
        %414 = vmatpush1.msra.mxu0 0.0
        %415 = vmatprep.subr.mxu0 0.0
        %416 = vmatpush1.msra.mxu0 0.0
        %417 = vmatprep.subr.mxu0 0.0
        %418 = vmatpush1.msra.mxu0 0.0
        %419 = vmatprep.subr.mxu0 0.0
        %420 = vmatpush1.msra.mxu0 0.0
        %421 = vmatprep.subr.mxu0 0.0
        %422 = vmatpush1.msra.mxu0 0.0
        %423 = vmatprep.subr.mxu0 0.0
        %424 = vmatpush1.msra.mxu0 0.0
        %425 = vmatprep.subr.mxu0 0.0
        %426 = vmatpush1.msra.mxu0 0.0
        %427 = vmatprep.subr.mxu0 0.0
        %428 = vmatpush1.msra.mxu0 0.0
        %429 = vmatprep.subr.mxu0 0.0
        %430 = vmatpush1.msra.mxu0 0.0
        %431 = vmatprep.subr.mxu0 0.0
        %432 = vmatpush1.msra.mxu0 0.0
        %433 = vmatprep.subr.mxu0 0.0
        %434 = vmatpush1.msra.mxu0 0.0
        %435 = vmatprep.mubr.f32.mxu0 0.0
        %436 = vmatmul.mubr.f32.gmra.mrb[0].mxu0 %v365
        %v437 = vpop.f32.mrb[0].mxu0
        %v438 = vadd.f32 0.0, %v437
        %v439 = vpop.f32.mrb[0].mxu0
        %v440 = vadd.f32 0.0, %v439
        %441 = vdwg.mxu0
        %v442 = vadd.f32 %v344, %v438
        %v443 = vadd.f32 %v346, %v440
        %s444 = scalar_lea.vmem %s1, 24
        %v445 = vld [vmem:[%s444] sm:$0xff]
        %v446 = vld [vmem:[%s168] sm:$0xff]
        %v447 = vld [vmem:[%s168 + $0x8] sm:$0xf]
        %v450 = vcombine.high %v446, %v446
        %451 = vrot.lane.b32.xlu0 %v446, 112
        %v452 = vpop.permute.xlu0 %451
        %453 = vrot.lane.b32.xlu0 %v450, 112
        %v454 = vpop.permute.xlu0 %453
        %455 = vrot.lane.b32.xlu0 %v447, 112
        %v456 = vpop.permute.xlu0 %455
        %vm457 = vcmask 916480
        %v458 = vsel %vm457, %v452, %v454
        %v459 = vsel %vm457, %v454, %v456
        %v461 = vsel %vm188, %v445, 0
        %v463 = vsel %vm192, %v458, 0
        %v465 = vsel %vm192, %v459, 0
        %467 = vmatprep.subr.mxu0 %v465
        %468 = vmatpush1.msra.mxu0 %v463
        %469 = vmatprep.subr.mxu0 0.0
        %470 = vmatpush1.msra.mxu0 0.0
        %471 = vmatprep.subr.mxu0 0.0
        %472 = vmatpush1.msra.mxu0 0.0
        %473 = vmatprep.subr.mxu0 0.0
        %474 = vmatpush1.msra.mxu0 0.0
        %475 = vmatprep.subr.mxu0 0.0
        %476 = vmatpush1.msra.mxu0 0.0
        %477 = vmatprep.subr.mxu0 0.0
        %478 = vmatpush1.msra.mxu0 0.0
        %479 = vmatprep.subr.mxu0 0.0
        %480 = vmatpush1.msra.mxu0 0.0
        %481 = vmatprep.subr.mxu0 0.0
        %482 = vmatpush1.msra.mxu0 0.0
        %483 = vmatprep.subr.mxu0 0.0
        %484 = vmatpush1.msra.mxu0 0.0
        %485 = vmatprep.subr.mxu0 0.0
        %486 = vmatpush1.msra.mxu0 0.0
        %487 = vmatprep.subr.mxu0 0.0
        %488 = vmatpush1.msra.mxu0 0.0
        %489 = vmatprep.subr.mxu0 0.0
        %490 = vmatpush1.msra.mxu0 0.0
        %491 = vmatprep.subr.mxu0 0.0
        %492 = vmatpush1.msra.mxu0 0.0
        %493 = vmatprep.subr.mxu0 0.0
        %494 = vmatpush1.msra.mxu0 0.0
        %495 = vmatprep.subr.mxu0 0.0
        %496 = vmatpush1.msra.mxu0 0.0
        %497 = vmatprep.subr.mxu0 0.0
        %498 = vmatpush1.msra.mxu0 0.0
        %499 = vmatprep.subr.mxu0 0.0
        %500 = vmatpush1.msra.mxu0 0.0
        %501 = vmatprep.subr.mxu0 0.0
        %502 = vmatpush1.msra.mxu0 0.0
        %503 = vmatprep.subr.mxu0 0.0
        %504 = vmatpush1.msra.mxu0 0.0
        %505 = vmatprep.subr.mxu0 0.0
        %506 = vmatpush1.msra.mxu0 0.0
        %507 = vmatprep.subr.mxu0 0.0
        %508 = vmatpush1.msra.mxu0 0.0
        %509 = vmatprep.subr.mxu0 0.0
        %510 = vmatpush1.msra.mxu0 0.0
        %511 = vmatprep.subr.mxu0 0.0
        %512 = vmatpush1.msra.mxu0 0.0
        %513 = vmatprep.subr.mxu0 0.0
        %514 = vmatpush1.msra.mxu0 0.0
        %515 = vmatprep.subr.mxu0 0.0
        %516 = vmatpush1.msra.mxu0 0.0
        %517 = vmatprep.subr.mxu0 0.0
        %518 = vmatpush1.msra.mxu0 0.0
        %519 = vmatprep.subr.mxu0 0.0
        %520 = vmatpush1.msra.mxu0 0.0
        %521 = vmatprep.subr.mxu0 0.0
        %522 = vmatpush1.msra.mxu0 0.0
        %523 = vmatprep.subr.mxu0 0.0
        %524 = vmatpush1.msra.mxu0 0.0
        %525 = vmatprep.subr.mxu0 0.0
        %526 = vmatpush1.msra.mxu0 0.0
        %527 = vmatprep.subr.mxu0 0.0
        %528 = vmatpush1.msra.mxu0 0.0
        %529 = vmatprep.subr.mxu0 0.0
        %530 = vmatpush1.msra.mxu0 0.0
        %531 = vmatprep.mubr.f32.mxu0 0.0
        %532 = vmatmul.mubr.f32.gmra.mrb[0].mxu0 %v461
        %v533 = vpop.f32.mrb[0].mxu0
        %v534 = vadd.f32 0.0, %v533
        %v535 = vpop.f32.mrb[0].mxu0
        %v536 = vadd.f32 0.0, %v535
        %537 = vdwg.mxu0
        %v538 = vadd.f32 %v442, %v534
        %v539 = vadd.f32 %v443, %v536
        %s540 = scalar_lea.vmem %s1, 32
        %v541 = vld [vmem:[%s540] sm:$0xff]
        %v542 = vld [vmem:[%s168] sm:$0xff]
        %v543 = vld [vmem:[%s168 + $0x8] sm:$0xf]
        %v546 = vcombine.high %v542, %v542
        %547 = vrot.lane.b32.xlu0 %v542, 111
        %v548 = vpop.permute.xlu0 %547
        %549 = vrot.lane.b32.xlu0 %v546, 111
        %v550 = vpop.permute.xlu0 %549
        %551 = vrot.lane.b32.xlu0 %v543, 111
        %v552 = vpop.permute.xlu0 %551
        %vm553 = vcmask 908288
        %v554 = vsel %vm553, %v548, %v550
        %v555 = vsel %vm553, %v550, %v552
        %v557 = vsel %vm188, %v541, 0
        %v559 = vsel %vm192, %v554, 0
        %v561 = vsel %vm192, %v555, 0
        %563 = vmatprep.subr.mxu0 %v561
        %564 = vmatpush1.msra.mxu0 %v559
        %565 = vmatprep.subr.mxu0 0.0
        %566 = vmatpush1.msra.mxu0 0.0
        %567 = vmatprep.subr.mxu0 0.0
        %568 = vmatpush1.msra.mxu0 0.0
        %569 = vmatprep.subr.mxu0 0.0
        %570 = vmatpush1.msra.mxu0 0.0
        %571 = vmatprep.subr.mxu0 0.0
        %572 = vmatpush1.msra.mxu0 0.0
        %573 = vmatprep.subr.mxu0 0.0
        %574 = vmatpush1.msra.mxu0 0.0
        %575 = vmatprep.subr.mxu0 0.0
        %576 = vmatpush1.msra.mxu0 0.0
        %577 = vmatprep.subr.mxu0 0.0
        %578 = vmatpush1.msra.mxu0 0.0
        %579 = vmatprep.subr.mxu0 0.0
        %580 = vmatpush1.msra.mxu0 0.0
        %581 = vmatprep.subr.mxu0 0.0
        %582 = vmatpush1.msra.mxu0 0.0
        %583 = vmatprep.subr.mxu0 0.0
        %584 = vmatpush1.msra.mxu0 0.0
        %585 = vmatprep.subr.mxu0 0.0
        %586 = vmatpush1.msra.mxu0 0.0
        %587 = vmatprep.subr.mxu0 0.0
        %588 = vmatpush1.msra.mxu0 0.0
        %589 = vmatprep.subr.mxu0 0.0
        %590 = vmatpush1.msra.mxu0 0.0
        %591 = vmatprep.subr.mxu0 0.0
        %592 = vmatpush1.msra.mxu0 0.0
        %593 = vmatprep.subr.mxu0 0.0
        %594 = vmatpush1.msra.mxu0 0.0
        %595 = vmatprep.subr.mxu0 0.0
        %596 = vmatpush1.msra.mxu0 0.0
        %597 = vmatprep.subr.mxu0 0.0
        %598 = vmatpush1.msra.mxu0 0.0
        %599 = vmatprep.subr.mxu0 0.0
        %600 = vmatpush1.msra.mxu0 0.0
        %601 = vmatprep.subr.mxu0 0.0
        %602 = vmatpush1.msra.mxu0 0.0
        %603 = vmatprep.subr.mxu0 0.0
        %604 = vmatpush1.msra.mxu0 0.0
        %605 = vmatprep.subr.mxu0 0.0
        %606 = vmatpush1.msra.mxu0 0.0
        %607 = vmatprep.subr.mxu0 0.0
        %608 = vmatpush1.msra.mxu0 0.0
        %609 = vmatprep.subr.mxu0 0.0
        %610 = vmatpush1.msra.mxu0 0.0
        %611 = vmatprep.subr.mxu0 0.0
        %612 = vmatpush1.msra.mxu0 0.0
        %613 = vmatprep.subr.mxu0 0.0
        %614 = vmatpush1.msra.mxu0 0.0
        %615 = vmatprep.subr.mxu0 0.0
        %616 = vmatpush1.msra.mxu0 0.0
        %617 = vmatprep.subr.mxu0 0.0
        %618 = vmatpush1.msra.mxu0 0.0
        %619 = vmatprep.subr.mxu0 0.0
        %620 = vmatpush1.msra.mxu0 0.0
        %621 = vmatprep.subr.mxu0 0.0
        %622 = vmatpush1.msra.mxu0 0.0
        %623 = vmatprep.subr.mxu0 0.0
        %624 = vmatpush1.msra.mxu0 0.0
        %625 = vmatprep.subr.mxu0 0.0
        %626 = vmatpush1.msra.mxu0 0.0
        %627 = vmatprep.mubr.f32.mxu0 0.0
        %628 = vmatmul.mubr.f32.gmra.mrb[0].mxu0 %v557
        %v629 = vpop.f32.mrb[0].mxu0
        %v630 = vadd.f32 0.0, %v629
        %v631 = vpop.f32.mrb[0].mxu0
        %v632 = vadd.f32 0.0, %v631
        %633 = vdwg.mxu0
        %v634 = vadd.f32 %v538, %v630
        %v635 = vadd.f32 %v539, %v632
        %s636 = scalar_lea.vmem %s1, 40
        %v637 = vld [vmem:[%s636] sm:$0xff]
        %v638 = vld [vmem:[%s168] sm:$0xff]
        %v639 = vld [vmem:[%s168 + $0x8] sm:$0xf]
        %v642 = vcombine.high %v638, %v638
        %643 = vrot.lane.b32.xlu0 %v638, 110
        %v644 = vpop.permute.xlu0 %643
        %645 = vrot.lane.b32.xlu0 %v642, 110
        %v646 = vpop.permute.xlu0 %645
        %647 = vrot.lane.b32.xlu0 %v639, 110
        %v648 = vpop.permute.xlu0 %647
        %vm649 = vcmask 900096
        %v650 = vsel %vm649, %v644, %v646
        %v651 = vsel %vm649, %v646, %v648
        %v653 = vsel %vm188, %v637, 0
        %v655 = vsel %vm192, %v650, 0
        %v657 = vsel %vm192, %v651, 0
        %659 = vmatprep.subr.mxu0 %v657
        %660 = vmatpush1.msra.mxu0 %v655
        %661 = vmatprep.subr.mxu0 0.0
        %662 = vmatpush1.msra.mxu0 0.0
        %663 = vmatprep.subr.mxu0 0.0
        %664 = vmatpush1.msra.mxu0 0.0
        %665 = vmatprep.subr.mxu0 0.0
        %666 = vmatpush1.msra.mxu0 0.0
        %667 = vmatprep.subr.mxu0 0.0
        %668 = vmatpush1.msra.mxu0 0.0
        %669 = vmatprep.subr.mxu0 0.0
        %670 = vmatpush1.msra.mxu0 0.0
        %671 = vmatprep.subr.mxu0 0.0
        %672 = vmatpush1.msra.mxu0 0.0
        %673 = vmatprep.subr.mxu0 0.0
        %674 = vmatpush1.msra.mxu0 0.0
        %675 = vmatprep.subr.mxu0 0.0
        %676 = vmatpush1.msra.mxu0 0.0
        %677 = vmatprep.subr.mxu0 0.0
        %678 = vmatpush1.msra.mxu0 0.0
        %679 = vmatprep.subr.mxu0 0.0
        %680 = vmatpush1.msra.mxu0 0.0
        %681 = vmatprep.subr.mxu0 0.0
        %682 = vmatpush1.msra.mxu0 0.0
        %683 = vmatprep.subr.mxu0 0.0
        %684 = vmatpush1.msra.mxu0 0.0
        %685 = vmatprep.subr.mxu0 0.0
        %686 = vmatpush1.msra.mxu0 0.0
        %687 = vmatprep.subr.mxu0 0.0
        %688 = vmatpush1.msra.mxu0 0.0
        %689 = vmatprep.subr.mxu0 0.0
        %690 = vmatpush1.msra.mxu0 0.0
        %691 = vmatprep.subr.mxu0 0.0
        %692 = vmatpush1.msra.mxu0 0.0
        %693 = vmatprep.subr.mxu0 0.0
        %694 = vmatpush1.msra.mxu0 0.0
        %695 = vmatprep.subr.mxu0 0.0
        %696 = vmatpush1.msra.mxu0 0.0
        %697 = vmatprep.subr.mxu0 0.0
        %698 = vmatpush1.msra.mxu0 0.0
        %699 = vmatprep.subr.mxu0 0.0
        %700 = vmatpush1.msra.mxu0 0.0
        %701 = vmatprep.subr.mxu0 0.0
        %702 = vmatpush1.msra.mxu0 0.0
        %703 = vmatprep.subr.mxu0 0.0
        %704 = vmatpush1.msra.mxu0 0.0
        %705 = vmatprep.subr.mxu0 0.0
        %706 = vmatpush1.msra.mxu0 0.0
        %707 = vmatprep.subr.mxu0 0.0
        %708 = vmatpush1.msra.mxu0 0.0
        %709 = vmatprep.subr.mxu0 0.0
        %710 = vmatpush1.msra.mxu0 0.0
        %711 = vmatprep.subr.mxu0 0.0
        %712 = vmatpush1.msra.mxu0 0.0
        %713 = vmatprep.subr.mxu0 0.0
        %714 = vmatpush1.msra.mxu0 0.0
        %715 = vmatprep.subr.mxu0 0.0
        %716 = vmatpush1.msra.mxu0 0.0
        %717 = vmatprep.subr.mxu0 0.0
        %718 = vmatpush1.msra.mxu0 0.0
        %719 = vmatprep.subr.mxu0 0.0
        %720 = vmatpush1.msra.mxu0 0.0
        %721 = vmatprep.subr.mxu0 0.0
        %722 = vmatpush1.msra.mxu0 0.0
        %723 = vmatprep.mubr.f32.mxu0 0.0
        %724 = vmatmul.mubr.f32.gmra.mrb[0].mxu0 %v653
        %v725 = vpop.f32.mrb[0].mxu0
        %v726 = vadd.f32 0.0, %v725
        %v727 = vpop.f32.mrb[0].mxu0
        %v728 = vadd.f32 0.0, %v727
        %729 = vdwg.mxu0
        %v730 = vadd.f32 %v634, %v726
        %v731 = vadd.f32 %v635, %v728
        %s732 = scalar_lea.vmem %s1, 48
        %v733 = vld [vmem:[%s732] sm:$0xff]
        %v734 = vld [vmem:[%s168] sm:$0xff]
        %v735 = vld [vmem:[%s168 + $0x8] sm:$0xf]
        %v738 = vcombine.high %v734, %v734
        %739 = vrot.lane.b32.xlu0 %v734, 96
        %v740 = vpop.permute.xlu0 %739
        %741 = vrot.lane.b32.xlu0 %v738, 96
        %v742 = vpop.permute.xlu0 %741
        %743 = vrot.lane.b32.xlu0 %v735, 96
        %v744 = vpop.permute.xlu0 %743
        %vm745 = vcmask 785408
        %v746 = vsel %vm745, %v740, %v742
        %v747 = vsel %vm745, %v742, %v744
        %v749 = vsel %vm188, %v733, 0
        %v751 = vsel %vm192, %v746, 0
        %v753 = vsel %vm192, %v747, 0
        %755 = vmatprep.subr.mxu0 %v753
        %756 = vmatpush1.msra.mxu0 %v751
        %757 = vmatprep.subr.mxu0 0.0
        %758 = vmatpush1.msra.mxu0 0.0
        %759 = vmatprep.subr.mxu0 0.0
        %760 = vmatpush1.msra.mxu0 0.0
        %761 = vmatprep.subr.mxu0 0.0
        %762 = vmatpush1.msra.mxu0 0.0
        %763 = vmatprep.subr.mxu0 0.0
        %764 = vmatpush1.msra.mxu0 0.0
        %765 = vmatprep.subr.mxu0 0.0
        %766 = vmatpush1.msra.mxu0 0.0
        %767 = vmatprep.subr.mxu0 0.0
        %768 = vmatpush1.msra.mxu0 0.0
        %769 = vmatprep.subr.mxu0 0.0
        %770 = vmatpush1.msra.mxu0 0.0
        %771 = vmatprep.subr.mxu0 0.0
        %772 = vmatpush1.msra.mxu0 0.0
        %773 = vmatprep.subr.mxu0 0.0
        %774 = vmatpush1.msra.mxu0 0.0
        %775 = vmatprep.subr.mxu0 0.0
        %776 = vmatpush1.msra.mxu0 0.0
        %777 = vmatprep.subr.mxu0 0.0
        %778 = vmatpush1.msra.mxu0 0.0
        %779 = vmatprep.subr.mxu0 0.0
        %780 = vmatpush1.msra.mxu0 0.0
        %781 = vmatprep.subr.mxu0 0.0
        %782 = vmatpush1.msra.mxu0 0.0
        %783 = vmatprep.subr.mxu0 0.0
        %784 = vmatpush1.msra.mxu0 0.0
        %785 = vmatprep.subr.mxu0 0.0
        %786 = vmatpush1.msra.mxu0 0.0
        %787 = vmatprep.subr.mxu0 0.0
        %788 = vmatpush1.msra.mxu0 0.0
        %789 = vmatprep.subr.mxu0 0.0
        %790 = vmatpush1.msra.mxu0 0.0
        %791 = vmatprep.subr.mxu0 0.0
        %792 = vmatpush1.msra.mxu0 0.0
        %793 = vmatprep.subr.mxu0 0.0
        %794 = vmatpush1.msra.mxu0 0.0
        %795 = vmatprep.subr.mxu0 0.0
        %796 = vmatpush1.msra.mxu0 0.0
        %797 = vmatprep.subr.mxu0 0.0
        %798 = vmatpush1.msra.mxu0 0.0
        %799 = vmatprep.subr.mxu0 0.0
        %800 = vmatpush1.msra.mxu0 0.0
        %801 = vmatprep.subr.mxu0 0.0
        %802 = vmatpush1.msra.mxu0 0.0
        %803 = vmatprep.subr.mxu0 0.0
        %804 = vmatpush1.msra.mxu0 0.0
        %805 = vmatprep.subr.mxu0 0.0
        %806 = vmatpush1.msra.mxu0 0.0
        %807 = vmatprep.subr.mxu0 0.0
        %808 = vmatpush1.msra.mxu0 0.0
        %809 = vmatprep.subr.mxu0 0.0
        %810 = vmatpush1.msra.mxu0 0.0
        %811 = vmatprep.subr.mxu0 0.0
        %812 = vmatpush1.msra.mxu0 0.0
        %813 = vmatprep.subr.mxu0 0.0
        %814 = vmatpush1.msra.mxu0 0.0
        %815 = vmatprep.subr.mxu0 0.0
        %816 = vmatpush1.msra.mxu0 0.0
        %817 = vmatprep.subr.mxu0 0.0
        %818 = vmatpush1.msra.mxu0 0.0
        %819 = vmatprep.mubr.f32.mxu0 0.0
        %820 = vmatmul.mubr.f32.gmra.mrb[0].mxu0 %v749
        %v821 = vpop.f32.mrb[0].mxu0
        %v822 = vadd.f32 0.0, %v821
        %v823 = vpop.f32.mrb[0].mxu0
        %v824 = vadd.f32 0.0, %v823
        %825 = vdwg.mxu0
        %v826 = vadd.f32 %v730, %v822
        %v827 = vadd.f32 %v731, %v824
        %s828 = scalar_lea.vmem %s1, 56
        %v829 = vld [vmem:[%s828] sm:$0xff]
        %v830 = vld [vmem:[%s168] sm:$0xff]
        %v831 = vld [vmem:[%s168 + $0x8] sm:$0xf]
        %v834 = vcombine.high %v830, %v830
        %835 = vrot.lane.b32.xlu0 %v830, 95
        %v836 = vpop.permute.xlu0 %835
        %837 = vrot.lane.b32.xlu0 %v834, 95
        %v838 = vpop.permute.xlu0 %837
        %839 = vrot.lane.b32.xlu0 %v831, 95
        %v840 = vpop.permute.xlu0 %839
        %vm841 = vcmask 777216
        %v842 = vsel %vm841, %v836, %v838
        %v843 = vsel %vm841, %v838, %v840
        %v845 = vsel %vm188, %v829, 0
        %v847 = vsel %vm192, %v842, 0
        %v849 = vsel %vm192, %v843, 0
        %851 = vmatprep.subr.mxu0 %v849
        %852 = vmatpush1.msra.mxu0 %v847
        %853 = vmatprep.subr.mxu0 0.0
        %854 = vmatpush1.msra.mxu0 0.0
        %855 = vmatprep.subr.mxu0 0.0
        %856 = vmatpush1.msra.mxu0 0.0
        %857 = vmatprep.subr.mxu0 0.0
        %858 = vmatpush1.msra.mxu0 0.0
        %859 = vmatprep.subr.mxu0 0.0
        %860 = vmatpush1.msra.mxu0 0.0
        %861 = vmatprep.subr.mxu0 0.0
        %862 = vmatpush1.msra.mxu0 0.0
        %863 = vmatprep.subr.mxu0 0.0
        %864 = vmatpush1.msra.mxu0 0.0
        %865 = vmatprep.subr.mxu0 0.0
        %866 = vmatpush1.msra.mxu0 0.0
        %867 = vmatprep.subr.mxu0 0.0
        %868 = vmatpush1.msra.mxu0 0.0
        %869 = vmatprep.subr.mxu0 0.0
        %870 = vmatpush1.msra.mxu0 0.0
        %871 = vmatprep.subr.mxu0 0.0
        %872 = vmatpush1.msra.mxu0 0.0
        %873 = vmatprep.subr.mxu0 0.0
        %874 = vmatpush1.msra.mxu0 0.0
        %875 = vmatprep.subr.mxu0 0.0
        %876 = vmatpush1.msra.mxu0 0.0
        %877 = vmatprep.subr.mxu0 0.0
        %878 = vmatpush1.msra.mxu0 0.0
        %879 = vmatprep.subr.mxu0 0.0
        %880 = vmatpush1.msra.mxu0 0.0
        %881 = vmatprep.subr.mxu0 0.0
        %882 = vmatpush1.msra.mxu0 0.0
        %883 = vmatprep.subr.mxu0 0.0
        %884 = vmatpush1.msra.mxu0 0.0
        %885 = vmatprep.subr.mxu0 0.0
        %886 = vmatpush1.msra.mxu0 0.0
        %887 = vmatprep.subr.mxu0 0.0
        %888 = vmatpush1.msra.mxu0 0.0
        %889 = vmatprep.subr.mxu0 0.0
        %890 = vmatpush1.msra.mxu0 0.0
        %891 = vmatprep.subr.mxu0 0.0
        %892 = vmatpush1.msra.mxu0 0.0
        %893 = vmatprep.subr.mxu0 0.0
        %894 = vmatpush1.msra.mxu0 0.0
        %895 = vmatprep.subr.mxu0 0.0
        %896 = vmatpush1.msra.mxu0 0.0
        %897 = vmatprep.subr.mxu0 0.0
        %898 = vmatpush1.msra.mxu0 0.0
        %899 = vmatprep.subr.mxu0 0.0
        %900 = vmatpush1.msra.mxu0 0.0
        %901 = vmatprep.subr.mxu0 0.0
        %902 = vmatpush1.msra.mxu0 0.0
        %903 = vmatprep.subr.mxu0 0.0
        %904 = vmatpush1.msra.mxu0 0.0
        %905 = vmatprep.subr.mxu0 0.0
        %906 = vmatpush1.msra.mxu0 0.0
        %907 = vmatprep.subr.mxu0 0.0
        %908 = vmatpush1.msra.mxu0 0.0
        %909 = vmatprep.subr.mxu0 0.0
        %910 = vmatpush1.msra.mxu0 0.0
        %911 = vmatprep.subr.mxu0 0.0
        %912 = vmatpush1.msra.mxu0 0.0
        %913 = vmatprep.subr.mxu0 0.0
        %914 = vmatpush1.msra.mxu0 0.0
        %915 = vmatprep.mubr.f32.mxu0 0.0
        %916 = vmatmul.mubr.f32.gmra.mrb[0].mxu0 %v845
        %v917 = vpop.f32.mrb[0].mxu0
        %v918 = vadd.f32 0.0, %v917
        %v919 = vpop.f32.mrb[0].mxu0
        %v920 = vadd.f32 0.0, %v919
        %921 = vdwg.mxu0
        %v922 = vadd.f32 %v826, %v918
        %v923 = vadd.f32 %v827, %v920
        %s924 = scalar_lea.vmem %s1, 64
        %v925 = vld [vmem:[%s924] sm:$0xff]
        %v926 = vld [vmem:[%s168] sm:$0xff]
        %v927 = vld [vmem:[%s168 + $0x8] sm:$0xf]
        %v930 = vcombine.high %v926, %v926
        %931 = vrot.lane.b32.xlu0 %v926, 94
        %v932 = vpop.permute.xlu0 %931
        %933 = vrot.lane.b32.xlu0 %v930, 94
        %v934 = vpop.permute.xlu0 %933
        %935 = vrot.lane.b32.xlu0 %v927, 94
        %v936 = vpop.permute.xlu0 %935
        %vm937 = vcmask 769024
        %v938 = vsel %vm937, %v932, %v934
        %v939 = vsel %vm937, %v934, %v936
        %v941 = vsel %vm188, %v925, 0
        %v943 = vsel %vm192, %v938, 0
        %v945 = vsel %vm192, %v939, 0
        %947 = vmatprep.subr.mxu0 %v945
        %948 = vmatpush1.msra.mxu0 %v943
        %949 = vmatprep.subr.mxu0 0.0
        %950 = vmatpush1.msra.mxu0 0.0
        %951 = vmatprep.subr.mxu0 0.0
        %952 = vmatpush1.msra.mxu0 0.0
        %953 = vmatprep.subr.mxu0 0.0
        %954 = vmatpush1.msra.mxu0 0.0
        %955 = vmatprep.subr.mxu0 0.0
        %956 = vmatpush1.msra.mxu0 0.0
        %957 = vmatprep.subr.mxu0 0.0
        %958 = vmatpush1.msra.mxu0 0.0
        %959 = vmatprep.subr.mxu0 0.0
        %960 = vmatpush1.msra.mxu0 0.0
        %961 = vmatprep.subr.mxu0 0.0
        %962 = vmatpush1.msra.mxu0 0.0
        %963 = vmatprep.subr.mxu0 0.0
        %964 = vmatpush1.msra.mxu0 0.0
        %965 = vmatprep.subr.mxu0 0.0
        %966 = vmatpush1.msra.mxu0 0.0
        %967 = vmatprep.subr.mxu0 0.0
        %968 = vmatpush1.msra.mxu0 0.0
        %969 = vmatprep.subr.mxu0 0.0
        %970 = vmatpush1.msra.mxu0 0.0
        %971 = vmatprep.subr.mxu0 0.0
        %972 = vmatpush1.msra.mxu0 0.0
        %973 = vmatprep.subr.mxu0 0.0
        %974 = vmatpush1.msra.mxu0 0.0
        %975 = vmatprep.subr.mxu0 0.0
        %976 = vmatpush1.msra.mxu0 0.0
        %977 = vmatprep.subr.mxu0 0.0
        %978 = vmatpush1.msra.mxu0 0.0
        %979 = vmatprep.subr.mxu0 0.0
        %980 = vmatpush1.msra.mxu0 0.0
        %981 = vmatprep.subr.mxu0 0.0
        %982 = vmatpush1.msra.mxu0 0.0
        %983 = vmatprep.subr.mxu0 0.0
        %984 = vmatpush1.msra.mxu0 0.0
        %985 = vmatprep.subr.mxu0 0.0
        %986 = vmatpush1.msra.mxu0 0.0
        %987 = vmatprep.subr.mxu0 0.0
        %988 = vmatpush1.msra.mxu0 0.0
        %989 = vmatprep.subr.mxu0 0.0
        %990 = vmatpush1.msra.mxu0 0.0
        %991 = vmatprep.subr.mxu0 0.0
        %992 = vmatpush1.msra.mxu0 0.0
        %993 = vmatprep.subr.mxu0 0.0
        %994 = vmatpush1.msra.mxu0 0.0
        %995 = vmatprep.subr.mxu0 0.0
        %996 = vmatpush1.msra.mxu0 0.0
        %997 = vmatprep.subr.mxu0 0.0
        %998 = vmatpush1.msra.mxu0 0.0
        %999 = vmatprep.subr.mxu0 0.0
        %1000 = vmatpush1.msra.mxu0 0.0
        %1001 = vmatprep.subr.mxu0 0.0
        %1002 = vmatpush1.msra.mxu0 0.0
        %1003 = vmatprep.subr.mxu0 0.0
        %1004 = vmatpush1.msra.mxu0 0.0
        %1005 = vmatprep.subr.mxu0 0.0
        %1006 = vmatpush1.msra.mxu0 0.0
        %1007 = vmatprep.subr.mxu0 0.0
        %1008 = vmatpush1.msra.mxu0 0.0
        %1009 = vmatprep.subr.mxu0 0.0
        %1010 = vmatpush1.msra.mxu0 0.0
        %1011 = vmatprep.mubr.f32.mxu0 0.0
        %1012 = vmatmul.mubr.f32.gmra.mrb[0].mxu0 %v941
        %v1013 = vpop.f32.mrb[0].mxu0
        %v1014 = vadd.f32 0.0, %v1013
        %v1015 = vpop.f32.mrb[0].mxu0
        %v1016 = vadd.f32 0.0, %v1015
        %1017 = vdwg.mxu0
        %v1018 = vadd.f32 %v922, %v1014
        %v1019 = vadd.f32 %v923, %v1016
        %1021 = vset.pattern.permute.xlu0 0
        %1022 = vperm.xlu0 %1021, %v169
        %v1023 = vpop.permute.xlu0 %1022
        %v1025 = vadd.f32 %v1018, %v1023
        %v1026 = vadd.f32 %v1019, %v1023
        %1027 = vst [vmem:[%s163] sm:$0xff] %v1025
        %1028 = vst [vmem:[%s163 + $0x8] sm:$0xff] %v1026
        %s1029 = sand.u32 %s93, 1
        %s1030 = scalar_lea.sflag [#allocation3], %s1029
        %s1031 = sand.u32 %s93, 1
        %s1032 = smul.addr %s1031, 16
        %s1033 = scalar_lea.vmem [#allocation2], %s1032
        // Predicated region
        $region33: #{tpu_custom_call.1} parent=31 // pred_check
          %p1034 = pneg %p103
        $region34: #{tpu_custom_call.1} parent=31 // pred_check_branch
          %1036 = sbr.rel (%p1034) target = $region36
        $region35: #{tpu_custom_call.1} parent=31 // pred_region
          %s1038 = ssub.s32 256, 256
          %1039 = vsyncadd %s1030, %s1038
          %s1040 = smul.addr %s17, 2
          %s1041 = smul.addr %s1040, 128
          %s1042 = scalar_lea.hbm %s3, %s1041
          %s1044 = sshll.u32 %s1033, 4
          %s1045 = int_to_ptr.vmem [resolvable:$true] %s1044
          %1047 = dma.vmem_to_hbm [thread:$0]  %s1045, 256, %s1042, %s1030
        $region36: #{tpu_custom_call.1} parent=31 // pred_fallthru
          _
      $region32: #{tpu_custom_call.1} parent=5 // pred_fallthru
        _
      %p1048 = scmp.le.s32.totalorder 2, %s12
      // Predicated region
      $region37: #{tpu_custom_call.1} parent=5 // pred_check
        %p1049 = pneg %p1048
      $region38: #{tpu_custom_call.1} parent=5 // pred_check_branch
        %1051 = sbr.rel (%p1049) target = $region40
      $region39: #{tpu_custom_call.1} parent=5 // pred_region
        %s1052 = ssub.s32 %s12, 2
        // Predicated region
        $region41: #{tpu_custom_call.1} parent=39 // pred_check
          %p1053 = pneg %p109
        $region42: #{tpu_custom_call.1} parent=39 // pred_check_branch
          %1055 = sbr.rel (%p1053) target = $region44
        $region43: #{tpu_custom_call.1} parent=39 // pred_region
          %s1056 = sand.u32 %s94, 1
          %s1057 = scalar_lea.sflag [#allocation3], %s1056
          %s1058 = sand.u32 %s94, 1
          %s1059 = smul.addr %s1058, 16
          %s1060 = scalar_lea.vmem [#allocation2], %s1059
          %1061 = dma.done %s1057, 256
        $region44: #{tpu_custom_call.1} parent=39 // pred_fallthru
          _
      $region40: #{tpu_custom_call.1} parent=5 // pred_fallthru
        _
    $region6: #{tpu_custom_call.1} parent=1 // loop_footer
      %s16 = sadd.s32 1, %s12
    $region7: #{tpu_custom_call.1} parent=1 // loop_footer_branch
      %11 = sbr.rel target = $region3
    $region8: #{tpu_custom_call.1} parent=1 // loop_exit
      _
    %1062 = vsyncpa [#allocation3], 1
    %s1063 = scalar_lea.sflag [#allocation3], 1
    %1064 = vsyncpa %s1063, 1

</llo_original>
